<compile_context>
chip_gen: v7x
topology: tpu7x:2x2x1
jax: 0.10.0
libtpu: 0.0.40
codegen_flags: <defaults>
</compile_context>

<pallas_src>
import math
import functools

import jax
import jax.numpy as jnp
from jax.experimental import pallas as pl
from jax.experimental.pallas import tpu as pltpu


# ---------------------------------------------------------------------------
# Pass 1: h = x @ W (bf16 MXU / f32 acc) and f = h @ [a1 | a2] (f32), fused.
# ---------------------------------------------------------------------------
def _proj_kernel(x_ref, w_ref, a_ref, h_ref, f_ref):
    # x_ref: (1, TM, Fin)   w_ref: (Fin, Fout)   a_ref: (Fout, 2)
    # h_ref: (1, TM, Fout) bf16    f_ref: (1, TM, 2) f32
    x = x_ref[0].astype(jnp.bfloat16)
    w = w_ref[...].astype(jnp.bfloat16)
    h = jnp.dot(x, w, preferred_element_type=jnp.float32)          # (TM, Fout) f32
    h_ref[0] = h.astype(h_ref.dtype)
    # Logit projection from the f32 accumulator (better logit accuracy than the
    # bf16 h), computed exactly once per node.
    f_ref[0] = jnp.dot(h, a_ref[...], preferred_element_type=jnp.float32)


# ---------------------------------------------------------------------------
# Pass 2: tiled attention with online softmax (flash-attention style)
# ---------------------------------------------------------------------------
def _attn_kernel(f1_ref, hk_ref, f2_ref, adj_ref, o_ref,
                 m_scr, l_scr, acc_scr, *, alpha, concat, tk, kv_resident):
    # f1_ref : (1, TQ, 1)  f32   -- h_q · a1 (precomputed, per q-tile)
    # hk_ref : (1, M, Fout) bf16 if resident else (1, TK, Fout) bf16
    # f2_ref : (1, 1, TK)  f32   -- h_k · a2 (precomputed, per k-tile)
    # adj_ref: (1, TQ, TK)       -- adjacency tile (any dtype, compared > 0)
    # o_ref  : (1, TQ, Fout)
    k_idx = pl.program_id(2)

    @pl.when(k_idx == 0)
    def _init():
        m_scr[...] = jnp.full(m_scr.shape, -jnp.inf, jnp.float32)
        l_scr[...] = jnp.zeros(l_scr.shape, jnp.float32)
        acc_scr[...] = jnp.zeros(acc_scr.shape, jnp.float32)

    if kv_resident:
        start = pl.multiple_of(k_idx * tk, tk)
        h_k = hk_ref[0, pl.ds(start, tk), :]                    # (TK, Fout) bf16
    else:
        h_k = hk_ref[0]                                         # (TK, Fout) bf16
    f2 = f2_ref[0]                                              # (1, TK) f32

    # Fused: logits -> LeakyReLU -> adjacency mask (single (TQ, TK) live tile).
    e = f1_ref[0] + f2                                          # (TQ,1)+(1,TK)
    e = jnp.where(e > 0, e, alpha * e)                          # LeakyReLU
    s = jnp.where(adj_ref[0] > 0, e, jnp.float32(-9e15))        # mask

    # Online-softmax update.  exp in bf16 (EUP), statistics in f32.
    # Note: a fully-masked tile transiently contributes p == 1; it is washed
    # out by corr underflowing to 0 once a real edge appears for that row, and
    # fully-masked rows degenerate to uniform attention exactly like the
    # reference softmax over -9e15 constants.
    m_prev = m_scr[...]
    m_new = jnp.maximum(m_prev, jnp.max(s, axis=-1, keepdims=True))
    corr = jnp.exp(m_prev - m_new)
    p = jnp.exp((s - m_new).astype(jnp.bfloat16))               # (TQ, TK) bf16
    l_scr[...] = corr * l_scr[...] + jnp.sum(p.astype(jnp.float32),
                                             axis=-1, keepdims=True)
    acc_scr[...] = corr * acc_scr[...] + jnp.dot(
        p, h_k, preferred_element_type=jnp.float32)
    m_scr[...] = m_new

    @pl.when(k_idx == pl.num_programs(2) - 1)
    def _finalize():
        # approx reciprocal adds ~2^-12 relative error to the softmax denom.
        out = acc_scr[...] * pl.reciprocal(l_scr[...], approx=True)
        if concat:
            out = jnp.where(out > 0, out, jnp.expm1(jnp.minimum(out, 0.0)))  # ELU
        o_ref[0] = out.astype(o_ref.dtype)


# ---------------------------------------------------------------------------
# Wrapper
# ---------------------------------------------------------------------------
def _pick_tile(n, candidates):
    for c in candidates:
        if c <= n and n % c == 0:
            return c
    return n


def gat_layer(x, adj, W, a, *, alpha=0.2, concat=True):
    """x: (B, M, Fin) f32, adj: (B, M, M), W: (Fin, Fout), a: (2*Fout, 1)."""
    B, M, Fin = x.shape
    Fout = W.shape[1]
    out_dtype = x.dtype

    # Pad M to a multiple of 128: keeps all tiles lane/sublane-aligned and
    # avoids tiny-tile fallbacks.  Padded rows/cols have adj == 0 (masked) and
    # are sliced off the output.
    M_pad = max(128, -(-M // 128) * 128)
    if M_pad != M:
        x = jnp.pad(x, ((0, 0), (0, M_pad - M), (0, 0)))
        adj = jnp.pad(adj, ((0, 0), (0, M_pad - M), (0, M_pad - M)))

    # Merge a = [a1; a2] into a single (Fout, 2) operand for pass 1.
    a_pair = jnp.concatenate([a[:Fout, :], a[Fout:, :]], axis=1)

    # Tile sizes (M_pad is a multiple of 128, so these always divide).
    TM = _pick_tile(M_pad, (512, 256, 128))
    tq_cands = (1024, 512, 256, 128)
    if B == 1:
        # keep >= 2 q-tiles when possible so both TensorCores get work (v7x).
        tq_cands = tuple(t for t in tq_cands if t <= max(128, M_pad // 2))
    TQ = _pick_tile(M_pad, tq_cands)
    TK = _pick_tile(M_pad, (1024, 512, 256, 128))
    vmem_limit = 48 * 1024 * 1024  # fits v7x (64 MiB physical) with headroom

    # --- pass 1: h = x @ W and f = h @ [a1|a2] ------------------------------
    h, f = pl.pallas_call(
        _proj_kernel,
        out_shape=(jax.ShapeDtypeStruct((B, M_pad, Fout), jnp.bfloat16),
                   jax.ShapeDtypeStruct((B, M_pad, 2), jnp.float32)),
        grid_spec=pltpu.PrefetchScalarGridSpec(
            num_scalar_prefetch=0,
            grid=(B, M_pad // TM),
            in_specs=[
                pl.BlockSpec((1, TM, Fin), lambda b, m: (b, m, 0)),
                pl.BlockSpec((Fin, Fout), lambda b, m: (0, 0)),
                pl.BlockSpec((Fout, 2), lambda b, m: (0, 0)),
            ],
            out_specs=[
                pl.BlockSpec((1, TM, Fout), lambda b, m: (b, m, 0)),
                pl.BlockSpec((1, TM, 2), lambda b, m: (b, m, 0)),
            ],
        ),
        compiler_params=pltpu.CompilerParams(
            dimension_semantics=("parallel", "parallel"),
            vmem_limit_bytes=vmem_limit),
    )(x, W, a_pair)

    # Tiny XLA reshuffles of the per-node logits (negligible traffic):
    f1c = f[:, :, 0:1]                              # (B, M_pad, 1): column form
    f2r = jnp.transpose(f[:, :, 1:2], (0, 2, 1))    # (B, 1, M_pad): row form

    # Keep the key-side h VMEM-resident (double-buffered bf16) if it fits;
    # otherwise fall back to per-k-tile streaming.
    kv_resident = (2 * M_pad * Fout * 2) <= 16 * 1024 * 1024
    if kv_resident:
        hk_spec = pl.BlockSpec((1, M_pad, Fout), lambda b, q, k: (b, 0, 0))
    else:
        hk_spec = pl.BlockSpec((1, TK, Fout), lambda b, q, k: (b, k, 0))

    # --- pass 2: flash-style attention over (batch, q-tile, k-tile) ---------
    kernel = functools.partial(_attn_kernel, alpha=float(alpha),
                               concat=bool(concat), tk=TK,
                               kv_resident=kv_resident)
    out = pl.pallas_call(
        kernel,
        out_shape=jax.ShapeDtypeStruct((B, M_pad, Fout), out_dtype),
        grid_spec=pltpu.PrefetchScalarGridSpec(
            num_scalar_prefetch=0,
            grid=(B, M_pad // TQ, M_pad // TK),
            in_specs=[
                pl.BlockSpec((1, TQ, 1), lambda b, q, k: (b, q, 0)),   # f1 (col)
                hk_spec,                                               # key-side h
                pl.BlockSpec((1, 1, TK), lambda b, q, k: (b, 0, k)),   # f2 (row)
                pl.BlockSpec((1, TQ, TK), lambda b, q, k: (b, q, k)),  # adj tile
            ],
            out_specs=pl.BlockSpec((1, TQ, Fout), lambda b, q, k: (b, q, 0)),
            scratch_shapes=[
                pltpu.VMEM((TQ, 1), jnp.float32),      # running max m
                pltpu.VMEM((TQ, 1), jnp.float32),      # running denom l
                pltpu.VMEM((TQ, Fout), jnp.float32),   # output accumulator
            ],
        ),
        compiler_params=pltpu.CompilerParams(
            dimension_semantics=("parallel", "parallel", "arbitrary"),
            vmem_limit_bytes=vmem_limit),
    )(f1c, h, f2r, adj)

    if M_pad != M:
        out = out[:, :M, :]
    return out


# ---------------------------------------------------------------------------
# Reference + test
# ---------------------------------------------------------------------------
def _xavier_uniform(key, shape, gain):
    fan_in, fan_out = shape[0], shape[1]
    bound = gain * math.sqrt(6.0 / (fan_in + fan_out))
    return jax.random.uniform(key, shape, jnp.float32, -bound, bound)


def _reference(x, adj, W, a, alpha, concat):
    # pure-f32 JAX reference mirroring the PyTorch forward
    h = jnp.matmul(x, W)
    E = W.shape[1]
    f1 = jnp.matmul(h, a[:E, :])
    f2 = jnp.matmul(h, a[E:, :])
    e = f1 + jnp.swapaxes(f2, -1, -2)
    e = jnp.where(e > 0, e, alpha * e)
    masked = jnp.where(adj > 0, e, -9e15)
    att = jax.nn.softmax(masked, axis=-1)
    h_prime = jnp.matmul(att, h)
    return jax.nn.elu(h_prime) if concat else h_prime


if __name__ == "__main__":
    B, M, Fin, Fout = 2, 128, 64, 128
    alpha = 0.2

    key = jax.random.PRNGKey(0)
    kW, ka, kx, kadj = jax.random.split(key, 4)

    # deterministic parameter init (matches nn.init.xavier_uniform_, gain=1.414)
    W = _xavier_uniform(kW, (Fin, Fout), gain=1.414)
    a = _xavier_uniform(ka, (2 * Fout, 1), gain=1.414)

    x = jax.random.normal(kx, (B, M, Fin), jnp.float32)
    # random sparse adjacency with self-loops
    adj = (jax.random.uniform(kadj, (B, M, M)) > 0.5).astype(jnp.float32)
    adj = jnp.maximum(adj, jnp.eye(M, dtype=jnp.float32)[None, :, :])

    out = gat_layer(x, adj, W, a, alpha=alpha, concat=True)
    out = jax.block_until_ready(out)

    ref = _reference(x, adj, W, a, alpha, concat=True)
    assert out.shape == (B, M, Fout)
    # bf16 MXU operands / bf16 exp (f32 statistics) -> loosened tolerance
    max_diff = float(jnp.max(jnp.abs(out - ref)))
    assert jnp.allclose(out, ref, atol=5e-2, rtol=5e-2), (
        f"mismatch vs reference, max abs diff = {max_diff}")

    print("KERNEL_OK")
</pallas_src>

<mosaic_0001>
module attributes {stable_mosaic.version = 11 : i64} {
  func.func @_proj_kernel(%arg0: i32, %arg1: i32, %arg2: memref<1x128x64xf32, #tpu.memory_space<vmem>>, %arg3: memref<64x128xf32, #tpu.memory_space<vmem>>, %arg4: memref<128x2xf32, #tpu.memory_space<vmem>>, %arg5: memref<1x128x128xbf16, #tpu.memory_space<vmem>>, %arg6: memref<1x128x2xf32, #tpu.memory_space<vmem>>) attributes {dimension_semantics = [#tpu.dimension_semantics<parallel>, #tpu.dimension_semantics<parallel>], iteration_bounds = array<i64: 2, 1>, scalar_prefetch = 0 : i64, scratch_operands = 0 : i64, tpu.core_type = #tpu.core_type<tc>, window_params = [{transform_indices = @transform_0, window_bounds = array<i64: 1, 128, 64>}, {pipeline_mode = #tpu.pipeline_mode<synchronous>, transform_indices = @transform_1, window_bounds = array<i64: 64, 128>}, {pipeline_mode = #tpu.pipeline_mode<synchronous>, transform_indices = @transform_2, window_bounds = array<i64: 128, 2>}, {transform_indices = @transform_3, window_bounds = array<i64: 1, 128, 128>}, {transform_indices = @transform_4, window_bounds = array<i64: 1, 128, 2>}]} {
    %c0 = arith.constant 0 : index
    %c0_0 = arith.constant 0 : index
    %c0_1 = arith.constant 0 : index
    %0 = vector.load %arg2[%c0, %c0_0, %c0_1] : memref<1x128x64xf32, #tpu.memory_space<vmem>>, vector<1x128x64xf32>
    %1 = vector.shape_cast %0 : vector<1x128x64xf32> to vector<128x64xf32>
    %2 = arith.truncf %1 : vector<128x64xf32> to vector<128x64xbf16>
    %c0_2 = arith.constant 0 : index
    %c0_3 = arith.constant 0 : index
    %3 = vector.load %arg3[%c0_2, %c0_3] : memref<64x128xf32, #tpu.memory_space<vmem>>, vector<64x128xf32>
    %4 = arith.truncf %3 : vector<64x128xf32> to vector<64x128xbf16>
    %cst = arith.constant dense<0.000000e+00> : vector<128x128xf32>
    %5 = tpu.matmul %2, %4, %cst {dimension_numbers = #tpu.dot_dimension_numbers<[1], [0], [0], [1], [0, 0, 1, 1], [], []>} : vector<128x64xbf16>, vector<64x128xbf16>, vector<128x128xf32> -> vector<128x128xf32>
    %6 = arith.truncf %5 : vector<128x128xf32> to vector<128x128xbf16>
    %c0_4 = arith.constant 0 : index
    %c0_5 = arith.constant 0 : index
    %c0_6 = arith.constant 0 : index
    %7 = vector.load %arg5[%c0_4, %c0_5, %c0_6] : memref<1x128x128xbf16, #tpu.memory_space<vmem>>, vector<1x128x128xbf16>
    %8 = vector.shape_cast %7 : vector<1x128x128xbf16> to vector<128x128xbf16>
    %9 = vector.shape_cast %6 : vector<128x128xbf16> to vector<1x128x128xbf16>
    tpu.vector_store %arg5[%c0_4, %c0_5, %c0_6], %9 {strides = array<i32>} : memref<1x128x128xbf16, #tpu.memory_space<vmem>>, vector<1x128x128xbf16>,
    %c0_7 = arith.constant 0 : index
    %c0_8 = arith.constant 0 : index
    %10 = vector.load %arg4[%c0_7, %c0_8] : memref<128x2xf32, #tpu.memory_space<vmem>>, vector<128x2xf32>
    %cst_9 = arith.constant dense<0.000000e+00> : vector<128x2xf32>
    %11 = tpu.matmul %5, %10, %cst_9 {dimension_numbers = #tpu.dot_dimension_numbers<[1], [0], [0], [1], [0, 0, 1, 1], [], []>} : vector<128x128xf32>, vector<128x2xf32>, vector<128x2xf32> -> vector<128x2xf32>
    %c0_10 = arith.constant 0 : index
    %c0_11 = arith.constant 0 : index
    %c0_12 = arith.constant 0 : index
    %12 = vector.load %arg6[%c0_10, %c0_11, %c0_12] : memref<1x128x2xf32, #tpu.memory_space<vmem>>, vector<1x128x2xf32>
    %13 = vector.shape_cast %12 : vector<1x128x2xf32> to vector<128x2xf32>
    %14 = vector.shape_cast %11 : vector<128x2xf32> to vector<1x128x2xf32>
    tpu.vector_store %arg6[%c0_10, %c0_11, %c0_12], %14 {strides = array<i32>} : memref<1x128x2xf32, #tpu.memory_space<vmem>>, vector<1x128x2xf32>,
    return
  }
  func.func @transform_0(%arg0: i32, %arg1: i32) -> (i32, i32, i32) {
    %c0_i32 = arith.constant 0 : i32
    %c0_i32_0 = arith.constant 0 : i32
    return %arg0, %arg1, %c0_i32 : i32, i32, i32
  }
  func.func @transform_1(%arg0: i32, %arg1: i32) -> (i32, i32) {
    %c0_i32 = arith.constant 0 : i32
    %c0_i32_0 = arith.constant 0 : i32
    %c0_i32_1 = arith.constant 0 : i32
    return %c0_i32, %c0_i32_0 : i32, i32
  }
  func.func @transform_2(%arg0: i32, %arg1: i32) -> (i32, i32) {
    %c0_i32 = arith.constant 0 : i32
    %c0_i32_0 = arith.constant 0 : i32
    %c0_i32_1 = arith.constant 0 : i32
    return %c0_i32, %c0_i32_0 : i32, i32
  }
  func.func @transform_3(%arg0: i32, %arg1: i32) -> (i32, i32, i32) {
    %c0_i32 = arith.constant 0 : i32
    %c0_i32_0 = arith.constant 0 : i32
    return %arg0, %arg1, %c0_i32 : i32, i32, i32
  }
  func.func @transform_4(%arg0: i32, %arg1: i32) -> (i32, i32, i32) {
    %c0_i32 = arith.constant 0 : i32
    %c0_i32_0 = arith.constant 0 : i32
    return %arg0, %arg1, %c0_i32 : i32, i32, i32
  }
}

</mosaic_0001>

<llo_original>
// kernel: tpu_custom_call.1
$region0: #{tpu_custom_call.1}
  #allocation0 [shape = 'u32[]', space=smem, size = 0x4, offset = 0x4, fixed_abs, tag = 'smem constant byte address 0x4 - core index']
  #allocation1 [shape = 'u32[144,128]{1,0:T(1,128)}', space=vmem, size = 0x12000, scoped, tag = 'internal scratch']
  %s0 = inlined_call_operand.vmem [shape: f32[2,128,64], index: 0, kind: input, shape index: {}]
  %s1 = inlined_call_operand.vmem [shape: f32[64,128], index: 1, kind: input, shape index: {}]
  %s2 = inlined_call_operand.vmem [shape: f32[128,2], index: 2, kind: input, shape index: {}]
  %s3 = inlined_call_operand.hbm [shape: bf16[2,128,128], index: 3, kind: output, shape index: {0}]
  %s4 = inlined_call_operand.vmem [shape: f32[2,128,2], index: 4, kind: output, shape index: {1}]
  %5 = xla_tuple %s3, %s4
  %s6 = sld [smem:[#allocation0]]
  $region53: #{tpu_custom_call.1} parent=0
    _
  %s8 = ssub.s32 1, %s6
  %s9 = scalar_select 0, %s8, %s6
  $region1: #{tpu_custom_call.1} parent=0
    #allocation2 [shape = 'u8[65536]{0}', space=vmem, size = 0x10000, scoped, tag = 'output window, operand 0']
    #allocation3 [shape = 's32[2]{0}', space=sflag, size = 0x8, scoped, tag = 'scoped memory for tpu_custom_call.1']
    %10 = vsyncpa [#allocation3], 0
    %s11 = scalar_lea.sflag [#allocation3], 1
    %12 = vsyncpa %s11, 0
    loop: start=0, step=1, limit=4
    $region2: #{tpu_custom_call.1} parent=1 // loop_pre_header
      _
    $region3: #{tpu_custom_call.1} parent=1 // loop_header
      %s14 = sphi 0, %s18
      %p15 = scmp.ge.s32.totalorder %s14, 4
      %s21 = sphi 0, %s33
      %s22 = sphi 0, %s29
      %s23 = sphi 0, %s21
      %s24 = sphi 0, %s22
      %s25 = sphi 0, %s23
      %s26 = sphi 0, %s24
      %s38 = sphi 0, %s40
      %s41 = sphi 0, %s38
      %s42 = sphi 0, %s41
      %s58 = sphi 0, %s42
      %s62 = sphi 0, %s62
      %s64 = sphi 0, %s62
      %s65 = sphi 0, %s64
      %s79 = sphi 0, %s65
      %s83 = sphi 0, %s83
      %s85 = sphi 0, %s83
      %s86 = sphi 0, %s85
      %s100 = sphi 0, %s86
      %s108 = sphi 0, %s110
      %s111 = sphi 0, %s108
      %s112 = sphi 0, %s111
      %s128 = sphi 0, %s112
      %s136 = sphi 0, %s138
      %s139 = sphi 0, %s136
      %s140 = sphi 0, %s139
      %s156 = sphi 0, %s140
    $region4: #{tpu_custom_call.1} parent=1 // loop_header_branch
      %17 = sbr.rel (%p15) target = $region8
    $region5: #{tpu_custom_call.1} parent=1 // loop_body
      %s19 = ssub.s32 %s14, 1
      %s20 = ssub.s32 %s14, 2
      %s27 = sadd.s32 1, %s22
      %p28 = scmp.ge.s32.totalorder %s27, 1
      %s29 = scalar_select %p28, 0, %s27
      %s30 = sadd.s32 1, %s21
      %s31 = scalar_select %p28, %s30, %s21
      %p32 = scmp.ge.s32.totalorder %s31, 2
      %s33 = scalar_select %p32, 0, %s31
      %s34 = ssub.s32 %s21, %s33
      %s35 = ssub.s32 %s22, %s29
      %s36 = sor.u32 %s34, %s35
      %p37 = scmp.eq.s32.totalorder %s36, 0
      %s39 = sadd.s32 %s38, 1
      %s40 = scalar_select %p37, %s38, %s39
      %p43 = pneg %p37
      %p44 = scmp.eq.s32.totalorder %s14, 1
      %p45 = por %p43, %p44
      %p46 = scmp.ne.s32.totalorder %s38, %s41
      %p47 = scmp.eq.s32.totalorder %s14, 0
      %p48 = por %p46, %p47
      %p49 = scmp.ne.s32.totalorder %s38, %s41
      %p50 = scmp.eq.s32.totalorder %s19, 1
      %p51 = por %p49, %p50
      %p52 = scmp.ne.s32.totalorder %s41, %s42
      %p53 = scmp.eq.s32.totalorder %s19, 0
      %p54 = por %p52, %p53
      %p55 = scmp.ne.s32.totalorder %s41, %s42
      %p56 = scmp.eq.s32.totalorder %s20, 1
      %p57 = por %p55, %p56
      %p59 = scmp.ne.s32.totalorder %s42, %s58
      %p60 = scmp.eq.s32.totalorder %s20, 0
      %p61 = por %p59, %p60
      %s63 = sadd.s32 %s62, 1
      %p66 = scmp.eq.s32.totalorder %s14, 1
      %p67 = scmp.ne.s32.totalorder %s62, %s64
      %p68 = scmp.eq.s32.totalorder %s14, 0
      %p69 = por %p67, %p68
      %p70 = scmp.ne.s32.totalorder %s62, %s64
      %p71 = scmp.eq.s32.totalorder %s19, 1
      %p72 = por %p70, %p71
      %p73 = scmp.ne.s32.totalorder %s64, %s65
      %p74 = scmp.eq.s32.totalorder %s19, 0
      %p75 = por %p73, %p74
      %p76 = scmp.ne.s32.totalorder %s64, %s65
      %p77 = scmp.eq.s32.totalorder %s20, 1
      %p78 = por %p76, %p77
      %p80 = scmp.ne.s32.totalorder %s65, %s79
      %p81 = scmp.eq.s32.totalorder %s20, 0
      %p82 = por %p80, %p81
      %s84 = sadd.s32 %s83, 1
      %p87 = scmp.eq.s32.totalorder %s14, 1
      %p88 = scmp.ne.s32.totalorder %s83, %s85
      %p89 = scmp.eq.s32.totalorder %s14, 0
      %p90 = por %p88, %p89
      %p91 = scmp.ne.s32.totalorder %s83, %s85
      %p92 = scmp.eq.s32.totalorder %s19, 1
      %p93 = por %p91, %p92
      %p94 = scmp.ne.s32.totalorder %s85, %s86
      %p95 = scmp.eq.s32.totalorder %s19, 0
      %p96 = por %p94, %p95
      %p97 = scmp.ne.s32.totalorder %s85, %s86
      %p98 = scmp.eq.s32.totalorder %s20, 1
      %p99 = por %p97, %p98
      %p101 = scmp.ne.s32.totalorder %s86, %s100
      %p102 = scmp.eq.s32.totalorder %s20, 0
      %p103 = por %p101, %p102
      %s104 = ssub.s32 %s21, %s33
      %s105 = ssub.s32 %s22, %s29
      %s106 = sor.u32 %s104, %s105
      %p107 = scmp.eq.s32.totalorder %s106, 0
      %s109 = sadd.s32 %s108, 1
      %s110 = scalar_select %p107, %s108, %s109
      %p113 = pneg %p107
      %p114 = scmp.eq.s32.totalorder %s14, 1
      %p115 = por %p113, %p114
      %p116 = scmp.ne.s32.totalorder %s108, %s111
      %p117 = scmp.eq.s32.totalorder %s14, 0
      %p118 = por %p116, %p117
      %p119 = scmp.ne.s32.totalorder %s108, %s111
      %p120 = scmp.eq.s32.totalorder %s19, 1
      %p121 = por %p119, %p120
      %p122 = scmp.ne.s32.totalorder %s111, %s112
      %p123 = scmp.eq.s32.totalorder %s19, 0
      %p124 = por %p122, %p123
      %p125 = scmp.ne.s32.totalorder %s111, %s112
      %p126 = scmp.eq.s32.totalorder %s20, 1
      %p127 = por %p125, %p126
      %p129 = scmp.ne.s32.totalorder %s112, %s128
      %p130 = scmp.eq.s32.totalorder %s20, 0
      %p131 = por %p129, %p130
      %s132 = ssub.s32 %s21, %s33
      %s133 = ssub.s32 %s22, %s29
      %s134 = sor.u32 %s132, %s133
      %p135 = scmp.eq.s32.totalorder %s134, 0
      %s137 = sadd.s32 %s136, 1
      %s138 = scalar_select %p135, %s136, %s137
      %p141 = pneg %p135
      %p142 = scmp.eq.s32.totalorder %s14, 1
      %p143 = por %p141, %p142
      %p144 = scmp.ne.s32.totalorder %s136, %s139
      %p145 = scmp.eq.s32.totalorder %s14, 0
      %p146 = por %p144, %p145
      %p147 = scmp.ne.s32.totalorder %s136, %s139
      %p148 = scmp.eq.s32.totalorder %s19, 1
      %p149 = por %p147, %p148
      %p150 = scmp.ne.s32.totalorder %s139, %s140
      %p151 = scmp.eq.s32.totalorder %s19, 0
      %p152 = por %p150, %p151
      %p153 = scmp.ne.s32.totalorder %s139, %s140
      %p154 = scmp.eq.s32.totalorder %s20, 1
      %p155 = por %p153, %p154
      %p157 = scmp.ne.s32.totalorder %s140, %s156
      %p158 = scmp.eq.s32.totalorder %s20, 0
      %p159 = por %p157, %p158
      %p160 = scmp.le.s32.totalorder 1, %s14
      %p161 = scmp.lt.s32.totalorder %s14, 3
      %p162 = pnand %p160, %p161
      %p163 = pneg %p162
      // Predicated region
      $region9: #{tpu_custom_call.1} parent=5 // pred_check
        _
      $region10: #{tpu_custom_call.1} parent=5 // pred_check_branch
        %165 = sbr.rel (%p162) target = $region12
      $region11: #{tpu_custom_call.1} parent=5 // pred_region
        %s166 = ssub.s32 %s14, 1
        // Predicated region
        $region13: #{tpu_custom_call.1} parent=11 // pred_check
          %p167 = pneg %p75
        $region14: #{tpu_custom_call.1} parent=11 // pred_check_branch
          %169 = sbr.rel (%p167) target = $region16
        $region15: #{tpu_custom_call.1} parent=11 // pred_region
          _
        $region16: #{tpu_custom_call.1} parent=11 // pred_fallthru
          _
        // Predicated region
        $region17: #{tpu_custom_call.1} parent=11 // pred_check
          %p170 = pneg %p96
        $region18: #{tpu_custom_call.1} parent=11 // pred_check_branch
          %172 = sbr.rel (%p170) target = $region20
        $region19: #{tpu_custom_call.1} parent=11 // pred_region
          _
        $region20: #{tpu_custom_call.1} parent=11 // pred_fallthru
          _
      $region12: #{tpu_custom_call.1} parent=5 // pred_fallthru
        _
      %p173 = scmp.lt.s32.totalorder %s14, 2
      // Predicated region
      $region21: #{tpu_custom_call.1} parent=5 // pred_check
        %p174 = pneg %p173
      $region22: #{tpu_custom_call.1} parent=5 // pred_check_branch
        %176 = sbr.rel (%p174) target = $region24
      $region23: #{tpu_custom_call.1} parent=5 // pred_region
        // Predicated region
        $region25: #{tpu_custom_call.1} parent=23 // pred_check
          %p177 = pneg %p48
        $region26: #{tpu_custom_call.1} parent=23 // pred_check_branch
          %179 = sbr.rel (%p177) target = $region28
        $region27: #{tpu_custom_call.1} parent=23 // pred_region
          %s180 = smul.u32 16, %s22
          %p181 = scmp.lt.s32.totalorder %s21, 1
          %s182 = scalar_select %p181, %s21, 1
          %p183 = scmp.lt.s32.totalorder %s180, 15
          %s184 = scalar_select %p183, %s180, 15
          %s185 = smul.addr %s182, 16
          %s186 = sadd.s32 %s184, %s185
          %s187 = smul.addr %s186, 8
          %s188 = scalar_lea.vmem %s0, %s187
          %s189 = smul.u32 16, %s22
        $region28: #{tpu_custom_call.1} parent=23 // pred_fallthru
          _
      $region24: #{tpu_custom_call.1} parent=5 // pred_fallthru
        _
      %p190 = scmp.le.s32.totalorder 1, %s14
      %p191 = scmp.lt.s32.totalorder %s14, 3
      %p192 = pnand %p190, %p191
      %p193 = pneg %p192
      // Predicated region
      $region29: #{tpu_custom_call.1} parent=5 // pred_check
        _
      $region30: #{tpu_custom_call.1} parent=5 // pred_check_branch
        %195 = sbr.rel (%p192) target = $region32
      $region31: #{tpu_custom_call.1} parent=5 // pred_region
        %s196 = ssub.s32 %s14, 1
        %s197 = smul.u32 16, %s24
        %p198 = scmp.lt.s32.totalorder %s23, 1
        %s199 = scalar_select %p198, %s23, 1
        %p200 = scmp.lt.s32.totalorder %s197, 15
        %s201 = scalar_select %p200, %s197, 15
        %s202 = smul.addr %s199, 16
        %s203 = sadd.s32 %s201, %s202
        %s204 = smul.addr %s203, 8
        %s205 = scalar_lea.vmem %s0, %s204
        %p206 = pneg %p54
        %p207 = pneg %p51
        %p208 = pneg %p75
        %p209 = pneg %p72
        %p210 = pneg %p96
        %p211 = pneg %p93
        %p212 = pneg %p124
        %p213 = pneg %p121
        %s214 = sand.u32 %s111, 1
        %s215 = scalar_lea.sflag [#allocation3], %s214
        %s216 = sand.u32 %s111, 1
        %s217 = smul.addr %s216, 64
        %s218 = scalar_lea.vmem [#allocation2], %s217
        %p219 = pneg %p152
        %p220 = pneg %p149
        %s221 = smul.u32 16, %s24
        %p222 = scmp.lt.s32.totalorder %s23, 1
        %s223 = scalar_select %p222, %s23, 1
        %p224 = scmp.lt.s32.totalorder %s221, 15
        %s225 = scalar_select %p224, %s221, 15
        %s226 = smul.addr %s223, 16
        %s227 = sadd.s32 %s225, %s226
        %s228 = smul.addr %s227, 8
        %s229 = scalar_lea.vmem %s4, %s228
        %s230 = smul.u32 16, %s24
        %p231 = scmp.lt.s32.totalorder %s23, 1
        %s232 = scalar_select %p231, %s23, 1
        %p233 = scmp.lt.s32.totalorder %s230, 15
        %s234 = scalar_select %p233, %s230, 15
        %s235 = smul.addr %s232, 16
        %s236 = sadd.s32 %s234, %s235
        %s237 = smul.addr %s236, 8
        %s238 = scalar_lea.vmem %s0, %s237
        %s239 = smul.u32 16, %s24
        %s240 = smul.u32 16, %s24
        %s241 = smul.u32 16, %s24
        %p242 = scmp.lt.s32.totalorder %s23, 1
        %s243 = scalar_select %p242, %s23, 1
        %p244 = scmp.lt.s32.totalorder %s241, 15
        %s245 = scalar_select %p244, %s241, 15
        %s246 = smul.addr %s243, 16
        %s247 = sadd.s32 %s245, %s246
        %s248 = smul.addr %s247, 8
        %s249 = scalar_lea.vmem %s4, %s248
        %s250 = smul.u32 16, %s24
        %v252 = vld [vmem:[%s238] sm:$0xff]
        %v253 = vld [vmem:[%s238 + $0x8] sm:$0xff]
        %v254 = vld [vmem:[%s238 + $0x10] sm:$0xff]
        %v255 = vld [vmem:[%s238 + $0x18] sm:$0xff]
        %v256 = vld [vmem:[%s238 + $0x20] sm:$0xff]
        %v257 = vld [vmem:[%s238 + $0x28] sm:$0xff]
        %v258 = vld [vmem:[%s238 + $0x30] sm:$0xff]
        %v259 = vld [vmem:[%s238 + $0x38] sm:$0xff]
        %v260 = vld [vmem:[%s238 + $0x40] sm:$0xff]
        %v261 = vld [vmem:[%s238 + $0x48] sm:$0xff]
        %v262 = vld [vmem:[%s238 + $0x50] sm:$0xff]
        %v263 = vld [vmem:[%s238 + $0x58] sm:$0xff]
        %v264 = vld [vmem:[%s238 + $0x60] sm:$0xff]
        %v265 = vld [vmem:[%s238 + $0x68] sm:$0xff]
        %v266 = vld [vmem:[%s238 + $0x70] sm:$0xff]
        %v267 = vld [vmem:[%s238 + $0x78] sm:$0xff]
        %v268 = vpack.c.bf16 %v253, %v252
        %v269 = vpack.c.bf16 %v255, %v254
        %v270 = vpack.c.bf16 %v257, %v256
        %v271 = vpack.c.bf16 %v259, %v258
        %v272 = vpack.c.bf16 %v261, %v260
        %v273 = vpack.c.bf16 %v263, %v262
        %v274 = vpack.c.bf16 %v265, %v264
        %v275 = vpack.c.bf16 %v267, %v266
        %v276 = vld [vmem:[%s1] sm:$0xff]
        %v277 = vld [vmem:[%s1 + $0x8] sm:$0xff]
        %v278 = vld [vmem:[%s1 + $0x10] sm:$0xff]
        %v279 = vld [vmem:[%s1 + $0x18] sm:$0xff]
        %v280 = vld [vmem:[%s1 + $0x20] sm:$0xff]
        %v281 = vld [vmem:[%s1 + $0x28] sm:$0xff]
        %v282 = vld [vmem:[%s1 + $0x30] sm:$0xff]
        %v283 = vld [vmem:[%s1 + $0x38] sm:$0xff]
        %v284 = vpack.c.bf16 %v277, %v276
        %v285 = vpack.c.bf16 %v279, %v278
        %v286 = vpack.c.bf16 %v281, %v280
        %v287 = vpack.c.bf16 %v283, %v282
        %vm288 = vcmask 523264
        %v290 = vsel %vm288, %v268, 0
        %v293 = vsel %vm288, %v269, 0
        %v296 = vsel %vm288, %v270, 0
        %v299 = vsel %vm288, %v271, 0
        %v302 = vsel %vm288, %v272, 0
        %v305 = vsel %vm288, %v273, 0
        %v308 = vsel %vm288, %v274, 0
        %v311 = vsel %vm288, %v275, 0
        %313 = vmatprep.subr.bf16.mxu0 0
        %314 = vmatpush1.bf16.msra.mxu0 %v284
        %315 = vmatprep.subr.bf16.mxu0 0
        %316 = vmatpush1.bf16.msra.mxu0 %v285
        %317 = vmatprep.subr.bf16.mxu0 0
        %318 = vmatpush1.bf16.msra.mxu0 %v286
        %319 = vmatprep.subr.bf16.mxu0 0
        %320 = vmatpush1.bf16.msra.mxu0 %v287
        %321 = vmatprep.subr.bf16.mxu0 0
        %322 = vmatpush1.bf16.msra.mxu0 0
        %323 = vmatprep.subr.bf16.mxu0 0
        %324 = vmatpush1.bf16.msra.mxu0 0
        %325 = vmatprep.subr.bf16.mxu0 0
        %326 = vmatpush1.bf16.msra.mxu0 0
        %327 = vmatprep.subr.bf16.mxu0 0
        %328 = vmatpush1.bf16.msra.mxu0 0
        %329 = vmatprep.subr.bf16.mxu0 0
        %330 = vmatpush1.bf16.msra.mxu0 0
        %331 = vmatprep.subr.bf16.mxu0 0
        %332 = vmatpush1.bf16.msra.mxu0 0
        %333 = vmatprep.subr.bf16.mxu0 0
        %334 = vmatpush1.bf16.msra.mxu0 0
        %335 = vmatprep.subr.bf16.mxu0 0
        %336 = vmatpush1.bf16.msra.mxu0 0
        %337 = vmatprep.subr.bf16.mxu0 0
        %338 = vmatpush1.bf16.msra.mxu0 0
        %339 = vmatprep.subr.bf16.mxu0 0
        %340 = vmatpush1.bf16.msra.mxu0 0
        %341 = vmatprep.subr.bf16.mxu0 0
        %342 = vmatpush1.bf16.msra.mxu0 0
        %343 = vmatprep.subr.bf16.mxu0 0
        %344 = vmatpush1.bf16.msra.mxu0 0
        %345 = vmatprep.mubr.bf16.mxu0 0
        %346 = vmatmul.mubr.bf16.gmra.mrb[0].mxu0 %v290
        %v347 = vpop.f32.mrb[0].mxu0
        %v348 = vadd.f32 0.0, %v347
        %v349 = vpop.f32.mrb[0].mxu0
        %v350 = vpop.f32.mrb[0].mxu0
        %v351 = vadd.f32 0.0, %v350
        %v352 = vpop.f32.mrb[0].mxu0
        %353 = vmatprep.mubr.bf16.mxu0 0
        %354 = vmatmul.mubr.bf16.gmra.mrb[0].mxu0 %v293
        %v355 = vpop.f32.mrb[0].mxu0
        %v356 = vadd.f32 0.0, %v355
        %v357 = vpop.f32.mrb[0].mxu0
        %v358 = vpop.f32.mrb[0].mxu0
        %v359 = vadd.f32 0.0, %v358
        %v360 = vpop.f32.mrb[0].mxu0
        %361 = vmatprep.mubr.bf16.mxu0 0
        %362 = vmatmul.mubr.bf16.gmra.mrb[0].mxu0 %v296
        %v363 = vpop.f32.mrb[0].mxu0
        %v364 = vadd.f32 0.0, %v363
        %v365 = vpop.f32.mrb[0].mxu0
        %v366 = vpop.f32.mrb[0].mxu0
        %v367 = vadd.f32 0.0, %v366
        %v368 = vpop.f32.mrb[0].mxu0
        %369 = vmatprep.mubr.bf16.mxu0 0
        %370 = vmatmul.mubr.bf16.gmra.mrb[0].mxu0 %v299
        %v371 = vpop.f32.mrb[0].mxu0
        %v372 = vadd.f32 0.0, %v371
        %v373 = vpop.f32.mrb[0].mxu0
        %v374 = vpop.f32.mrb[0].mxu0
        %v375 = vadd.f32 0.0, %v374
        %v376 = vpop.f32.mrb[0].mxu0
        %377 = vmatprep.mubr.bf16.mxu0 0
        %378 = vmatmul.mubr.bf16.gmra.mrb[0].mxu0 %v302
        %v379 = vpop.f32.mrb[0].mxu0
        %v380 = vadd.f32 0.0, %v379
        %v381 = vpop.f32.mrb[0].mxu0
        %v382 = vpop.f32.mrb[0].mxu0
        %v383 = vadd.f32 0.0, %v382
        %v384 = vpop.f32.mrb[0].mxu0
        %385 = vmatprep.mubr.bf16.mxu0 0
        %386 = vmatmul.mubr.bf16.gmra.mrb[0].mxu0 %v305
        %v387 = vpop.f32.mrb[0].mxu0
        %v388 = vadd.f32 0.0, %v387
        %v389 = vpop.f32.mrb[0].mxu0
        %v390 = vpop.f32.mrb[0].mxu0
        %v391 = vadd.f32 0.0, %v390
        %v392 = vpop.f32.mrb[0].mxu0
        %393 = vmatprep.mubr.bf16.mxu0 0
        %394 = vmatmul.mubr.bf16.gmra.mrb[0].mxu0 %v308
        %v395 = vpop.f32.mrb[0].mxu0
        %v396 = vadd.f32 0.0, %v395
        %v397 = vpop.f32.mrb[0].mxu0
        %v398 = vpop.f32.mrb[0].mxu0
        %v399 = vadd.f32 0.0, %v398
        %v400 = vpop.f32.mrb[0].mxu0
        %401 = vmatprep.mubr.bf16.mxu0 0
        %402 = vmatmul.mubr.bf16.gmra.mrb[0].mxu0 %v311
        %v403 = vpop.f32.mrb[0].mxu0
        %v404 = vadd.f32 0.0, %v403
        %v405 = vpop.f32.mrb[0].mxu0
        %v406 = vpop.f32.mrb[0].mxu0
        %v407 = vadd.f32 0.0, %v406
        %v408 = vpop.f32.mrb[0].mxu0
        %409 = vdwg.mxu0
        %v410 = vpack.c.bf16 %v351, %v348
        %v411 = vpack.c.bf16 %v359, %v356
        %v412 = vpack.c.bf16 %v367, %v364
        %v413 = vpack.c.bf16 %v375, %v372
        %v414 = vpack.c.bf16 %v383, %v380
        %v415 = vpack.c.bf16 %v391, %v388
        %v416 = vpack.c.bf16 %v399, %v396
        %v417 = vpack.c.bf16 %v407, %v404
        %v426 = vunpack.c.l.b16 %v410
        %v427 = vunpack.c.h.b16 %v410
        %v428 = vunpack.c.l.b16 %v411
        %v429 = vunpack.c.h.b16 %v411
        %v430 = vunpack.c.l.b16 %v412
        %v431 = vunpack.c.h.b16 %v412
        %v432 = vunpack.c.l.b16 %v413
        %v433 = vunpack.c.h.b16 %v413
        %v434 = vunpack.c.l.b16 %v414
        %v435 = vunpack.c.h.b16 %v414
        %v436 = vunpack.c.l.b16 %v415
        %v437 = vunpack.c.h.b16 %v415
        %v438 = vunpack.c.l.b16 %v416
        %v439 = vunpack.c.h.b16 %v416
        %v440 = vunpack.c.l.b16 %v417
        %v441 = vunpack.c.h.b16 %v417
        %v442 = vpack.c.b16 %v426, %v426
        %v443 = vpack.c.b16 %v427, %v427
        %v444 = vpack.c.b16 %v428, %v428
        %v445 = vpack.c.b16 %v429, %v429
        %v446 = vpack.c.b16 %v430, %v430
        %v447 = vpack.c.b16 %v431, %v431
        %v448 = vpack.c.b16 %v432, %v432
        %v449 = vpack.c.b16 %v433, %v433
        %v450 = vpack.c.b16 %v434, %v434
        %v451 = vpack.c.b16 %v435, %v435
        %v452 = vpack.c.b16 %v436, %v436
        %v453 = vpack.c.b16 %v437, %v437
        %v454 = vpack.c.b16 %v438, %v438
        %v455 = vpack.c.b16 %v439, %v439
        %v456 = vpack.c.b16 %v440, %v440
        %v457 = vpack.c.b16 %v441, %v441
        %474 = vst [vmem:[%s218] sm:$0xf] %v442
        %475 = vst [vmem:[%s218 + $0x4] sm:$0xf] %v443
        %476 = vst [vmem:[%s218 + $0x8] sm:$0xf] %v444
        %477 = vst [vmem:[%s218 + $0xc] sm:$0xf] %v445
        %478 = vst [vmem:[%s218 + $0x10] sm:$0xf] %v446
        %479 = vst [vmem:[%s218 + $0x14] sm:$0xf] %v447
        %480 = vst [vmem:[%s218 + $0x18] sm:$0xf] %v448
        %481 = vst [vmem:[%s218 + $0x1c] sm:$0xf] %v449
        %482 = vst [vmem:[%s218 + $0x20] sm:$0xf] %v450
        %483 = vst [vmem:[%s218 + $0x24] sm:$0xf] %v451
        %484 = vst [vmem:[%s218 + $0x28] sm:$0xf] %v452
        %485 = vst [vmem:[%s218 + $0x2c] sm:$0xf] %v453
        %486 = vst [vmem:[%s218 + $0x30] sm:$0xf] %v454
        %487 = vst [vmem:[%s218 + $0x34] sm:$0xf] %v455
        %488 = vst [vmem:[%s218 + $0x38] sm:$0xf] %v456
        %489 = vst [vmem:[%s218 + $0x3c] sm:$0xf] %v457
        %v490 = vld [vmem:[%s2] sm:$0xff]
        %v491 = vld [vmem:[%s2 + $0x8] sm:$0xff]
        %v492 = vld [vmem:[%s2 + $0x10] sm:$0xff]
        %v493 = vld [vmem:[%s2 + $0x18] sm:$0xff]
        %v494 = vld [vmem:[%s2 + $0x20] sm:$0xff]
        %v495 = vld [vmem:[%s2 + $0x28] sm:$0xff]
        %v496 = vld [vmem:[%s2 + $0x30] sm:$0xff]
        %v497 = vld [vmem:[%s2 + $0x38] sm:$0xff]
        %v498 = vld [vmem:[%s2 + $0x40] sm:$0xff]
        %v499 = vld [vmem:[%s2 + $0x48] sm:$0xff]
        %v500 = vld [vmem:[%s2 + $0x50] sm:$0xff]
        %v501 = vld [vmem:[%s2 + $0x58] sm:$0xff]
        %v502 = vld [vmem:[%s2 + $0x60] sm:$0xff]
        %v503 = vld [vmem:[%s2 + $0x68] sm:$0xff]
        %v504 = vld [vmem:[%s2 + $0x70] sm:$0xff]
        %v505 = vld [vmem:[%s2 + $0x78] sm:$0xff]
        %506 = vmatprep.subr.mxu0 0.0
        %507 = vmatpush1.msra.mxu0 %v490
        %508 = vmatprep.subr.mxu0 0.0
        %509 = vmatpush1.msra.mxu0 %v491
        %510 = vmatprep.subr.mxu0 0.0
        %511 = vmatpush1.msra.mxu0 %v492
        %512 = vmatprep.subr.mxu0 0.0
        %513 = vmatpush1.msra.mxu0 %v493
        %514 = vmatprep.subr.mxu0 0.0
        %515 = vmatpush1.msra.mxu0 %v494
        %516 = vmatprep.subr.mxu0 0.0
        %517 = vmatpush1.msra.mxu0 %v495
        %518 = vmatprep.subr.mxu0 0.0
        %519 = vmatpush1.msra.mxu0 %v496
        %520 = vmatprep.subr.mxu0 0.0
        %521 = vmatpush1.msra.mxu0 %v497
        %522 = vmatprep.subr.mxu0 0.0
        %523 = vmatpush1.msra.mxu0 %v498
        %524 = vmatprep.subr.mxu0 0.0
        %525 = vmatpush1.msra.mxu0 %v499
        %526 = vmatprep.subr.mxu0 0.0
        %527 = vmatpush1.msra.mxu0 %v500
        %528 = vmatprep.subr.mxu0 0.0
        %529 = vmatpush1.msra.mxu0 %v501
        %530 = vmatprep.subr.mxu0 0.0
        %531 = vmatpush1.msra.mxu0 %v502
        %532 = vmatprep.subr.mxu0 0.0
        %533 = vmatpush1.msra.mxu0 %v503
        %534 = vmatprep.subr.mxu0 0.0
        %535 = vmatpush1.msra.mxu0 %v504
        %536 = vmatprep.subr.mxu0 0.0
        %537 = vmatpush1.msra.mxu0 %v505
        %538 = vmatprep.subr.mxu0 0.0
        %539 = vmatpush1.msra.mxu0 0.0
        %540 = vmatprep.subr.mxu0 0.0
        %541 = vmatpush1.msra.mxu0 0.0
        %542 = vmatprep.subr.mxu0 0.0
        %543 = vmatpush1.msra.mxu0 0.0
        %544 = vmatprep.subr.mxu0 0.0
        %545 = vmatpush1.msra.mxu0 0.0
        %546 = vmatprep.subr.mxu0 0.0
        %547 = vmatpush1.msra.mxu0 0.0
        %548 = vmatprep.subr.mxu0 0.0
        %549 = vmatpush1.msra.mxu0 0.0
        %550 = vmatprep.subr.mxu0 0.0
        %551 = vmatpush1.msra.mxu0 0.0
        %552 = vmatprep.subr.mxu0 0.0
        %553 = vmatpush1.msra.mxu0 0.0
        %554 = vmatprep.subr.mxu0 0.0
        %555 = vmatpush1.msra.mxu0 0.0
        %556 = vmatprep.subr.mxu0 0.0
        %557 = vmatpush1.msra.mxu0 0.0
        %558 = vmatprep.subr.mxu0 0.0
        %559 = vmatpush1.msra.mxu0 0.0
        %560 = vmatprep.subr.mxu0 0.0
        %561 = vmatpush1.msra.mxu0 0.0
        %562 = vmatprep.subr.mxu0 0.0
        %563 = vmatpush1.msra.mxu0 0.0
        %564 = vmatprep.subr.mxu0 0.0
        %565 = vmatpush1.msra.mxu0 0.0
        %566 = vmatprep.subr.mxu0 0.0
        %567 = vmatpush1.msra.mxu0 0.0
        %568 = vmatprep.subr.mxu0 0.0
        %569 = vmatpush1.msra.mxu0 0.0
        %570 = vmatprep.mubr.f32.mxu0 0.0
        %571 = vmatmul.mubr.f32.gmra.mrb[0].mxu0 %v348
        %v572 = vpop.f32.mrb[0].mxu0
        %v573 = vadd.f32 0.0, %v572
        %v574 = vpop.f32.mrb[0].mxu0
        %575 = vmatprep.mubr.f32.mxu0 0.0
        %576 = vmatmul.mubr.f32.gmra.mrb[0].mxu0 %v351
        %v577 = vpop.f32.mrb[0].mxu0
        %v578 = vadd.f32 0.0, %v577
        %v579 = vpop.f32.mrb[0].mxu0
        %580 = vmatprep.mubr.f32.mxu0 0.0
        %581 = vmatmul.mubr.f32.gmra.mrb[0].mxu0 %v356
        %v582 = vpop.f32.mrb[0].mxu0
        %v583 = vadd.f32 0.0, %v582
        %v584 = vpop.f32.mrb[0].mxu0
        %585 = vmatprep.mubr.f32.mxu0 0.0
        %586 = vmatmul.mubr.f32.gmra.mrb[0].mxu0 %v359
        %v587 = vpop.f32.mrb[0].mxu0
        %v588 = vadd.f32 0.0, %v587
        %v589 = vpop.f32.mrb[0].mxu0
        %590 = vmatprep.mubr.f32.mxu0 0.0
        %591 = vmatmul.mubr.f32.gmra.mrb[0].mxu0 %v364
        %v592 = vpop.f32.mrb[0].mxu0
        %v593 = vadd.f32 0.0, %v592
        %v594 = vpop.f32.mrb[0].mxu0
        %595 = vmatprep.mubr.f32.mxu0 0.0
        %596 = vmatmul.mubr.f32.gmra.mrb[0].mxu0 %v367
        %v597 = vpop.f32.mrb[0].mxu0
        %v598 = vadd.f32 0.0, %v597
        %v599 = vpop.f32.mrb[0].mxu0
        %600 = vmatprep.mubr.f32.mxu0 0.0
        %601 = vmatmul.mubr.f32.gmra.mrb[0].mxu0 %v372
        %v602 = vpop.f32.mrb[0].mxu0
        %v603 = vadd.f32 0.0, %v602
        %v604 = vpop.f32.mrb[0].mxu0
        %605 = vmatprep.mubr.f32.mxu0 0.0
        %606 = vmatmul.mubr.f32.gmra.mrb[0].mxu0 %v375
        %v607 = vpop.f32.mrb[0].mxu0
        %v608 = vadd.f32 0.0, %v607
        %v609 = vpop.f32.mrb[0].mxu0
        %610 = vmatprep.mubr.f32.mxu0 0.0
        %611 = vmatmul.mubr.f32.gmra.mrb[0].mxu0 %v380
        %v612 = vpop.f32.mrb[0].mxu0
        %v613 = vadd.f32 0.0, %v612
        %v614 = vpop.f32.mrb[0].mxu0
        %615 = vmatprep.mubr.f32.mxu0 0.0
        %616 = vmatmul.mubr.f32.gmra.mrb[0].mxu0 %v383
        %v617 = vpop.f32.mrb[0].mxu0
        %v618 = vadd.f32 0.0, %v617
        %v619 = vpop.f32.mrb[0].mxu0
        %620 = vmatprep.mubr.f32.mxu0 0.0
        %621 = vmatmul.mubr.f32.gmra.mrb[0].mxu0 %v388
        %v622 = vpop.f32.mrb[0].mxu0
        %v623 = vadd.f32 0.0, %v622
        %v624 = vpop.f32.mrb[0].mxu0
        %625 = vmatprep.mubr.f32.mxu0 0.0
        %626 = vmatmul.mubr.f32.gmra.mrb[0].mxu0 %v391
        %v627 = vpop.f32.mrb[0].mxu0
        %v628 = vadd.f32 0.0, %v627
        %v629 = vpop.f32.mrb[0].mxu0
        %630 = vmatprep.mubr.f32.mxu0 0.0
        %631 = vmatmul.mubr.f32.gmra.mrb[0].mxu0 %v396
        %v632 = vpop.f32.mrb[0].mxu0
        %v633 = vadd.f32 0.0, %v632
        %v634 = vpop.f32.mrb[0].mxu0
        %635 = vmatprep.mubr.f32.mxu0 0.0
        %636 = vmatmul.mubr.f32.gmra.mrb[0].mxu0 %v399
        %v637 = vpop.f32.mrb[0].mxu0
        %v638 = vadd.f32 0.0, %v637
        %v639 = vpop.f32.mrb[0].mxu0
        %640 = vmatprep.mubr.f32.mxu0 0.0
        %641 = vmatmul.mubr.f32.gmra.mrb[0].mxu0 %v404
        %v642 = vpop.f32.mrb[0].mxu0
        %v643 = vadd.f32 0.0, %v642
        %v644 = vpop.f32.mrb[0].mxu0
        %645 = vmatprep.mubr.f32.mxu0 0.0
        %646 = vmatmul.mubr.f32.gmra.mrb[0].mxu0 %v407
        %v647 = vpop.f32.mrb[0].mxu0
        %v648 = vadd.f32 0.0, %v647
        %v649 = vpop.f32.mrb[0].mxu0
        %650 = vdwg.mxu0
        %vm651 = vcmask 15360
        %652 = vst.msk [vmem:[%s249] sm:$0xff] %vm651, %v573
        %653 = vst.msk [vmem:[%s249 + $0x8] sm:$0xff] %vm651, %v578
        %654 = vst.msk [vmem:[%s249 + $0x10] sm:$0xff] %vm651, %v583
        %655 = vst.msk [vmem:[%s249 + $0x18] sm:$0xff] %vm651, %v588
        %656 = vst.msk [vmem:[%s249 + $0x20] sm:$0xff] %vm651, %v593
        %657 = vst.msk [vmem:[%s249 + $0x28] sm:$0xff] %vm651, %v598
        %658 = vst.msk [vmem:[%s249 + $0x30] sm:$0xff] %vm651, %v603
        %659 = vst.msk [vmem:[%s249 + $0x38] sm:$0xff] %vm651, %v608
        %660 = vst.msk [vmem:[%s249 + $0x40] sm:$0xff] %vm651, %v613
        %661 = vst.msk [vmem:[%s249 + $0x48] sm:$0xff] %vm651, %v618
        %662 = vst.msk [vmem:[%s249 + $0x50] sm:$0xff] %vm651, %v623
        %663 = vst.msk [vmem:[%s249 + $0x58] sm:$0xff] %vm651, %v628
        %664 = vst.msk [vmem:[%s249 + $0x60] sm:$0xff] %vm651, %v633
        %665 = vst.msk [vmem:[%s249 + $0x68] sm:$0xff] %vm651, %v638
        %666 = vst.msk [vmem:[%s249 + $0x70] sm:$0xff] %vm651, %v643
        %667 = vst.msk [vmem:[%s249 + $0x78] sm:$0xff] %vm651, %v648
        %s668 = sand.u32 %s111, 1
        %s669 = scalar_lea.sflag [#allocation3], %s668
        %s670 = sand.u32 %s111, 1
        %s671 = smul.addr %s670, 64
        %s672 = scalar_lea.vmem [#allocation2], %s671
        %s673 = smul.u32 16, %s24
        %p674 = scmp.lt.s32.totalorder %s23, 1
        %s675 = scalar_select %p674, %s23, 1
        %p676 = scmp.lt.s32.totalorder %s673, 15
        %s677 = scalar_select %p676, %s673, 15
        %s678 = smul.addr %s675, 16
        %s679 = sadd.s32 %s677, %s678
        %s680 = smul.addr %s679, 8
        %s681 = scalar_lea.vmem %s4, %s680
        // Predicated region
        $region33: #{tpu_custom_call.1} parent=31 // pred_check
          %p682 = pneg %p121
        $region34: #{tpu_custom_call.1} parent=31 // pred_check_branch
          %684 = sbr.rel (%p682) target = $region36
        $region35: #{tpu_custom_call.1} parent=31 // pred_region
          %s685 = smul.u32 16, %s24
          %s687 = ssub.s32 1024, 1024
          %688 = vsyncadd %s669, %s687
          %s689 = smul.addr %s23, 16
          %s690 = sadd.s32 %s685, %s689
          %s691 = smul.addr %s690, 64
          %s692 = scalar_lea.hbm %s3, %s691
          %s693 = sshll.u32 %s672, 4
          %s694 = int_to_ptr.vmem [resolvable:$true] %s693
          %699 = dma.vmem_to_hbm [thread:$0]  %s694, 1024, %s692, %s669, 64, 64, 4
        $region36: #{tpu_custom_call.1} parent=31 // pred_fallthru
          _
        // Predicated region
        $region37: #{tpu_custom_call.1} parent=31 // pred_check
          %p700 = pneg %p149
        $region38: #{tpu_custom_call.1} parent=31 // pred_check_branch
          %702 = sbr.rel (%p700) target = $region40
        $region39: #{tpu_custom_call.1} parent=31 // pred_region
          %s703 = smul.u32 16, %s24
        $region40: #{tpu_custom_call.1} parent=31 // pred_fallthru
          _
      $region32: #{tpu_custom_call.1} parent=5 // pred_fallthru
        _
      %p704 = scmp.le.s32.totalorder 2, %s14
      // Predicated region
      $region41: #{tpu_custom_call.1} parent=5 // pred_check
        %p705 = pneg %p704
      $region42: #{tpu_custom_call.1} parent=5 // pred_check_branch
        %707 = sbr.rel (%p705) target = $region44
      $region43: #{tpu_custom_call.1} parent=5 // pred_region
        %s708 = ssub.s32 %s14, 2
        // Predicated region
        $region45: #{tpu_custom_call.1} parent=43 // pred_check
          %p709 = pneg %p127
        $region46: #{tpu_custom_call.1} parent=43 // pred_check_branch
          %711 = sbr.rel (%p709) target = $region48
        $region47: #{tpu_custom_call.1} parent=43 // pred_region
          %s712 = sand.u32 %s112, 1
          %s713 = scalar_lea.sflag [#allocation3], %s712
          %s714 = sand.u32 %s112, 1
          %s715 = smul.addr %s714, 64
          %s716 = scalar_lea.vmem [#allocation2], %s715
          %717 = dma.done %s713, 1024
        $region48: #{tpu_custom_call.1} parent=43 // pred_fallthru
          _
        // Predicated region
        $region49: #{tpu_custom_call.1} parent=43 // pred_check
          %p718 = pneg %p155
        $region50: #{tpu_custom_call.1} parent=43 // pred_check_branch
          %720 = sbr.rel (%p718) target = $region52
        $region51: #{tpu_custom_call.1} parent=43 // pred_region
          %s721 = smul.u32 16, %s26
          %p722 = scmp.lt.s32.totalorder %s25, 1
          %s723 = scalar_select %p722, %s25, 1
          %p724 = scmp.lt.s32.totalorder %s721, 15
          %s725 = scalar_select %p724, %s721, 15
          %s726 = smul.addr %s723, 16
          %s727 = sadd.s32 %s725, %s726
          %s728 = smul.addr %s727, 8
          %s729 = scalar_lea.vmem %s4, %s728
        $region52: #{tpu_custom_call.1} parent=43 // pred_fallthru
          _
      $region44: #{tpu_custom_call.1} parent=5 // pred_fallthru
        _
    $region6: #{tpu_custom_call.1} parent=1 // loop_footer
      %s18 = sadd.s32 1, %s14
    $region7: #{tpu_custom_call.1} parent=1 // loop_footer_branch
      %13 = sbr.rel target = $region3
    $region8: #{tpu_custom_call.1} parent=1 // loop_exit
      _
    %730 = vsyncpa [#allocation3], 1
    %s731 = scalar_lea.sflag [#allocation3], 1
    %732 = vsyncpa %s731, 1

</llo_original>
